<compile_context>
chip_gen: v5e
topology: v5e:2x2
jax: 0.10.0
libtpu: 0.0.40
codegen_flags: <defaults>
</compile_context>

<pallas_src>
import jax
import jax.numpy as jnp
from jax import lax
from jax.experimental import pallas as pl
from jax.experimental.pallas import tpu as pltpu

HIDDEN = 60   # fixed by the module definition
OUT = 1


def _round_up(n, m):
    return ((n + m - 1) // m) * m


def mlp_kernel(x_ref, w1_ref, b1_ref, w2_ref, b2_ref, w3_ref, b3_ref, o_ref):
    # x_ref: (TB, F) native dtype; w1: (F, 60); w2: (60, 60) in compute dtype
    # b1/b2: (1, 60) f32; w3: (1, 60) f32 row; b3: (1,) f32 in SMEM
    # o_ref: (1, 1, TB) f32 lane-dense sigmoid outputs

    # In-kernel cast (hidden under the x DMA) instead of a wrapper-side astype.
    x = x_ref[...].astype(w1_ref.dtype)

    # layer1 + ReLU (MXU, f32 accumulation)
    h1 = jnp.dot(x, w1_ref[...], preferred_element_type=jnp.float32)
    h1 = jnp.maximum(h1 + b1_ref[...], 0.0)                      # (TB, 60)
    # dropout1: identity (inference)

    # layer2 + ReLU
    h2 = jnp.dot(h1.astype(w2_ref.dtype), w2_ref[...],
                 preferred_element_type=jnp.float32)
    h2 = jnp.maximum(h2 + b2_ref[...], 0.0)                      # (TB, 60)
    # dropout2: identity (inference)

    # Output layer, lane-dense: (1,60) x (TB,60)^T -> (1, TB) row, so the
    # bias/sigmoid/store tail is ~1 vreg and stores are unmasked full-width.
    logits = lax.dot_general(
        w3_ref[...], h2,
        dimension_numbers=(((1,), (1,)), ((), ())),
        preferred_element_type=jnp.float32) + b3_ref[0]          # (1, TB)
    o_ref[0] = jax.nn.sigmoid(logits).astype(o_ref.dtype)


def simple_nn_forward(x, params, *, block_b=2048, compute_dtype=jnp.bfloat16):
    """x: (B, F). params: dict w1,b1,w2,b2,w3,b3 with w's stored (in, out)."""
    B, F = x.shape
    w1, b1 = params["w1"], params["b1"]        # (F, 60), (1, 60)
    w2, b2 = params["w2"], params["b2"]        # (60, 60), (1, 60)
    w3, b3 = params["w3"], params["b3"]        # (60, 1),  (1, 1)

    x_item = jnp.dtype(x.dtype).itemsize
    w_item = jnp.dtype(compute_dtype).itemsize

    # --- batch tile selection ------------------------------------------------
    B_r8 = _round_up(B, 8)
    # Keep the double-buffered x tile within a fixed budget so large F still
    # pipelines on v7x (64 MiB VMEM) and v5e (16 MiB scoped default).
    X_TILE_BUDGET = 16 << 20                                  # 2 * TB * F * item
    tb_vmem_cap = max(8, (X_TILE_BUDGET // (2 * max(F, 1) * x_item)) // 8 * 8)
    TB = max(8, min(block_b, B_r8, tb_vmem_cap) // 8 * 8)
    # v7x megacore: ensure >= 2 grid steps on the "parallel" axis when possible.
    if B_r8 >= 16:
        TB = min(TB, _round_up(-(-B_r8 // 2), 8))
    num_tiles = pl.cdiv(B, TB)

    # --- VMEM budget estimate -> explicit scoped limit -----------------------
    lane = 128
    est = 2 * (TB * F * x_item                        # x (double-buffered)
               + _round_up(F, 8) * lane * w_item      # w1 (lane-padded)
               + 64 * lane * w_item                   # w2
               + 3 * 8 * lane * 4                     # b1, b2, w3 rows
               + 8 * _round_up(TB, lane) * 4)         # output block
    est += 8 * TB * lane * 4                          # h1/h2 intermediates headroom
    vmem_limit = int(min(48 << 20, max(24 << 20, 2 * est)))

    # Small one-time weight casts (weights are tiny; x is NOT cast here).
    w1_c = w1.astype(compute_dtype)
    w2_c = w2.astype(compute_dtype)
    b1_f = b1.reshape(1, HIDDEN).astype(jnp.float32)
    b2_f = b2.reshape(1, HIDDEN).astype(jnp.float32)
    w3_row = w3.reshape(1, HIDDEN).astype(jnp.float32)     # (1, 60) row
    b3_s = b3.reshape(-1).astype(jnp.float32)               # (1,) scalar -> SMEM

    out = pl.pallas_call(
        mlp_kernel,
        out_shape=jax.ShapeDtypeStruct((num_tiles, 1, TB), jnp.float32),
        grid=(num_tiles,),
        in_specs=[
            pl.BlockSpec((TB, F), lambda i: (i, 0)),              # x: pipelined (ragged tail ok)
            pl.BlockSpec((F, HIDDEN), lambda i: (0, 0)),          # w1: resident
            pl.BlockSpec((1, HIDDEN), lambda i: (0, 0)),          # b1
            pl.BlockSpec((HIDDEN, HIDDEN), lambda i: (0, 0)),     # w2
            pl.BlockSpec((1, HIDDEN), lambda i: (0, 0)),          # b2
            pl.BlockSpec((1, HIDDEN), lambda i: (0, 0)),          # w3 row
            pl.BlockSpec(memory_space=pltpu.MemorySpace.SMEM),    # b3 scalar
        ],
        out_specs=pl.BlockSpec((1, 1, TB), lambda i: (i, 0, 0)),  # lane-dense row per tile
        compiler_params=pltpu.CompilerParams(
            dimension_semantics=("parallel",),    # megacore sharding on v7x
            vmem_limit_bytes=vmem_limit,
        ),
    )(x, w1_c, b1_f, w2_c, b2_f, w3_row, b3_s)

    # (num_tiles, 1, TB) -> flat -> drop the ragged-tail garbage -> (B, 1)
    return out.reshape(num_tiles * TB)[:B].reshape(B, OUT)


def init_params(key, num_features):
    """Deterministic init mimicking PyTorch's default uniform(-1/sqrt(fan_in))."""
    def linear(key, fan_in, fan_out):
        kw, kb = jax.random.split(key)
        bound = 1.0 / jnp.sqrt(fan_in)
        w = jax.random.uniform(kw, (fan_in, fan_out), jnp.float32, -bound, bound)
        b = jax.random.uniform(kb, (1, fan_out), jnp.float32, -bound, bound)
        return w, b

    k1, k2, k3 = jax.random.split(key, 3)
    w1, b1 = linear(k1, num_features, HIDDEN)
    w2, b2 = linear(k2, HIDDEN, HIDDEN)
    w3, b3 = linear(k3, HIDDEN, OUT)
    return {"w1": w1, "b1": b1, "w2": w2, "b2": b2, "w3": w3, "b3": b3}


def reference_forward(x, params):
    h1 = jnp.maximum(x @ params["w1"] + params["b1"], 0.0)
    h2 = jnp.maximum(h1 @ params["w2"] + params["b2"], 0.0)
    return jax.nn.sigmoid(h2 @ params["w3"] + params["b3"])


if __name__ == "__main__":
    key = jax.random.PRNGKey(0)
    kx, kp, kx2 = jax.random.split(key, 3)

    B, F = 8, 32
    x = jax.random.normal(kx, (B, F), jnp.float32)
    params = init_params(kp, F)
    ref = reference_forward(x, params)

    # f32 compute path (single tile)
    out_f32 = jax.block_until_ready(
        simple_nn_forward(x, params, compute_dtype=jnp.float32))
    assert out_f32.shape == (B, OUT)
    assert jnp.allclose(out_f32, ref, atol=1e-4, rtol=1e-4)

    # default bf16 compute path (f32 accumulation); x streamed f32, cast in-kernel
    out_bf16 = jax.block_until_ready(simple_nn_forward(x, params))
    assert out_bf16.shape == (B, OUT)
    assert jnp.allclose(out_bf16, ref, atol=2e-2)

    # multi-tile grid with a ragged last block (B not a multiple of the tile;
    # no jnp.pad copy — Pallas boundary block handles the tail)
    B2 = 20
    x2 = jax.random.normal(kx2, (B2, F), jnp.float32)
    ref2 = reference_forward(x2, params)
    out2 = jax.block_until_ready(
        simple_nn_forward(x2, params, block_b=8, compute_dtype=jnp.float32))
    assert out2.shape == (B2, OUT)
    assert jnp.allclose(out2, ref2, atol=1e-4, rtol=1e-4)

    print("KERNEL_OK")
</pallas_src>

<mosaic_0001>
module attributes {stable_mosaic.version = 11 : i64} {
  func.func @mlp_kernel(%arg0: i32, %arg1: memref<8x32xf32, #tpu.memory_space<vmem>>, %arg2: memref<32x60xf32, #tpu.memory_space<vmem>>, %arg3: memref<1x60xf32, #tpu.memory_space<vmem>>, %arg4: memref<60x60xf32, #tpu.memory_space<vmem>>, %arg5: memref<1x60xf32, #tpu.memory_space<vmem>>, %arg6: memref<1x60xf32, #tpu.memory_space<vmem>>, %arg7: memref<1xf32, #tpu.memory_space<smem>>, %arg8: memref<1x1x8xf32, #tpu.memory_space<vmem>>) attributes {dimension_semantics = [#tpu.dimension_semantics<parallel>], iteration_bounds = array<i64: 1>, scalar_prefetch = 0 : i64, scratch_operands = 0 : i64, tpu.core_type = #tpu.core_type<tc>, window_params = [{transform_indices = @transform_0, window_bounds = array<i64: 8, 32>}, {pipeline_mode = #tpu.pipeline_mode<synchronous>, transform_indices = @transform_1, window_bounds = array<i64: 32, 60>}, {pipeline_mode = #tpu.pipeline_mode<synchronous>, transform_indices = @transform_2, window_bounds = array<i64: 1, 60>}, {pipeline_mode = #tpu.pipeline_mode<synchronous>, transform_indices = @transform_3, window_bounds = array<i64: 60, 60>}, {pipeline_mode = #tpu.pipeline_mode<synchronous>, transform_indices = @transform_4, window_bounds = array<i64: 1, 60>}, {pipeline_mode = #tpu.pipeline_mode<synchronous>, transform_indices = @transform_5, window_bounds = array<i64: 1, 60>}, {transform_indices = @transform_6, window_bounds = array<i64: 1>}, {transform_indices = @transform_7, window_bounds = array<i64: 1, 1, 8>}]} {
    %c0 = arith.constant 0 : index
    %c0_0 = arith.constant 0 : index
    %0 = vector.load %arg1[%c0, %c0_0] : memref<8x32xf32, #tpu.memory_space<vmem>>, vector<8x32xf32>
    %c0_1 = arith.constant 0 : index
    %c0_2 = arith.constant 0 : index
    %1 = vector.load %arg2[%c0_1, %c0_2] : memref<32x60xf32, #tpu.memory_space<vmem>>, vector<32x60xf32>
    %cst = arith.constant dense<0.000000e+00> : vector<8x60xf32>
    %2 = tpu.matmul %0, %1, %cst {dimension_numbers = #tpu.dot_dimension_numbers<[1], [0], [0], [1], [0, 0, 1, 1], [], []>} : vector<8x32xf32>, vector<32x60xf32>, vector<8x60xf32> -> vector<8x60xf32>
    %c0_3 = arith.constant 0 : index
    %c0_4 = arith.constant 0 : index
    %3 = vector.load %arg3[%c0_3, %c0_4] : memref<1x60xf32, #tpu.memory_space<vmem>>, vector<1x60xf32>
    %4 = vector.broadcast %3 : vector<1x60xf32> to vector<8x60xf32>
    %5 = arith.addf %2, %4 : vector<8x60xf32>
    %cst_5 = arith.constant 0.000000e+00 : f32
    %6 = vector.broadcast %cst_5 : f32 to vector<8x60xf32>
    %7 = arith.maximumf %5, %6 : vector<8x60xf32>
    %c0_6 = arith.constant 0 : index
    %c0_7 = arith.constant 0 : index
    %8 = vector.load %arg4[%c0_6, %c0_7] : memref<60x60xf32, #tpu.memory_space<vmem>>, vector<60x60xf32>
    %cst_8 = arith.constant dense<0.000000e+00> : vector<8x60xf32>
    %9 = tpu.matmul %7, %8, %cst_8 {dimension_numbers = #tpu.dot_dimension_numbers<[1], [0], [0], [1], [0, 0, 1, 1], [], []>} : vector<8x60xf32>, vector<60x60xf32>, vector<8x60xf32> -> vector<8x60xf32>
    %c0_9 = arith.constant 0 : index
    %c0_10 = arith.constant 0 : index
    %10 = vector.load %arg5[%c0_9, %c0_10] : memref<1x60xf32, #tpu.memory_space<vmem>>, vector<1x60xf32>
    %11 = vector.broadcast %10 : vector<1x60xf32> to vector<8x60xf32>
    %12 = arith.addf %9, %11 : vector<8x60xf32>
    %cst_11 = arith.constant 0.000000e+00 : f32
    %13 = vector.broadcast %cst_11 : f32 to vector<8x60xf32>
    %14 = arith.maximumf %12, %13 : vector<8x60xf32>
    %c0_12 = arith.constant 0 : index
    %c0_13 = arith.constant 0 : index
    %15 = vector.load %arg6[%c0_12, %c0_13] : memref<1x60xf32, #tpu.memory_space<vmem>>, vector<1x60xf32>
    %cst_14 = arith.constant dense<0.000000e+00> : vector<1x8xf32>
    %16 = tpu.matmul %15, %14, %cst_14 {dimension_numbers = #tpu.dot_dimension_numbers<[1], [1], [0], [0], [0, 0, 1, 0], [], []>} : vector<1x60xf32>, vector<8x60xf32>, vector<1x8xf32> -> vector<1x8xf32>
    %c0_15 = arith.constant 0 : index
    %17 = memref.load %arg7[%c0_15] : memref<1xf32, #tpu.memory_space<smem>>
    %18 = vector.broadcast %17 : f32 to vector<1x8xf32>
    %19 = arith.addf %16, %18 : vector<1x8xf32>
    %20 = arith.negf %19 : vector<1x8xf32>
    %21 = math.exp %20 : vector<1x8xf32>
    %cst_16 = arith.constant 1.000000e+00 : f32
    %22 = vector.broadcast %cst_16 : f32 to vector<1x8xf32>
    %23 = arith.addf %22, %21 : vector<1x8xf32>
    %24 = arith.divf %22, %23 : vector<1x8xf32>
    %c0_17 = arith.constant 0 : index
    %c0_18 = arith.constant 0 : index
    %c0_19 = arith.constant 0 : index
    %25 = vector.load %arg8[%c0_17, %c0_18, %c0_19] : memref<1x1x8xf32, #tpu.memory_space<vmem>>, vector<1x1x8xf32>
    %26 = vector.shape_cast %25 : vector<1x1x8xf32> to vector<1x8xf32>
    %27 = vector.shape_cast %24 : vector<1x8xf32> to vector<1x1x8xf32>
    tpu.vector_store %arg8[%c0_17, %c0_18, %c0_19], %27 {strides = array<i32>} : memref<1x1x8xf32, #tpu.memory_space<vmem>>, vector<1x1x8xf32>,
    return
  }
  func.func @transform_0(%arg0: i32) -> (i32, i32) {
    %c0_i32 = arith.constant 0 : i32
    %c0_i32_0 = arith.constant 0 : i32
    return %arg0, %c0_i32 : i32, i32
  }
  func.func @transform_1(%arg0: i32) -> (i32, i32) {
    %c0_i32 = arith.constant 0 : i32
    %c0_i32_0 = arith.constant 0 : i32
    %c0_i32_1 = arith.constant 0 : i32
    return %c0_i32, %c0_i32_0 : i32, i32
  }
  func.func @transform_2(%arg0: i32) -> (i32, i32) {
    %c0_i32 = arith.constant 0 : i32
    %c0_i32_0 = arith.constant 0 : i32
    %c0_i32_1 = arith.constant 0 : i32
    return %c0_i32, %c0_i32_0 : i32, i32
  }
  func.func @transform_3(%arg0: i32) -> (i32, i32) {
    %c0_i32 = arith.constant 0 : i32
    %c0_i32_0 = arith.constant 0 : i32
    %c0_i32_1 = arith.constant 0 : i32
    return %c0_i32, %c0_i32_0 : i32, i32
  }
  func.func @transform_4(%arg0: i32) -> (i32, i32) {
    %c0_i32 = arith.constant 0 : i32
    %c0_i32_0 = arith.constant 0 : i32
    %c0_i32_1 = arith.constant 0 : i32
    return %c0_i32, %c0_i32_0 : i32, i32
  }
  func.func @transform_5(%arg0: i32) -> (i32, i32) {
    %c0_i32 = arith.constant 0 : i32
    %c0_i32_0 = arith.constant 0 : i32
    %c0_i32_1 = arith.constant 0 : i32
    return %c0_i32, %c0_i32_0 : i32, i32
  }
  func.func @transform_6(%arg0: i32) -> i32 {
    %c0_i32 = arith.constant 0 : i32
    %c0_i32_0 = arith.constant 0 : i32
    return %c0_i32 : i32
  }
  func.func @transform_7(%arg0: i32) -> (i32, i32, i32) {
    %c0_i32 = arith.constant 0 : i32
    %c0_i32_0 = arith.constant 0 : i32
    %c0_i32_1 = arith.constant 0 : i32
    return %arg0, %c0_i32, %c0_i32_0 : i32, i32, i32
  }
}

</mosaic_0001>

<llo_original>
// kernel: tpu_custom_call.1
$region0: #{tpu_custom_call.1}
  #allocation0 [shape = 'u32[]', space=smem, size = 0x4, offset = 0x4, fixed_abs, tag = 'smem constant byte address 0x4 - core index']
  #allocation1 [shape = 'u32[72,128]{1,0:T(1,128)}', space=vmem, size = 0x9000, scoped, tag = 'internal scratch']
  #allocation2 [shape = 'f32[1]{0:T(128)S(6)}', space=smem, size = 0x200, scoped, tag = 'scoped memory for tpu_custom_call.1']
  %s0 = inlined_call_operand.hbm [shape: f32[8,32], index: 0, kind: input, shape index: {}]
  %s1 = inlined_call_operand.hbm [shape: f32[32,60], index: 1, kind: input, shape index: {}]
  %s2 = inlined_call_operand.vmem [shape: f32[1,60], index: 2, kind: input, shape index: {}]
  %s3 = inlined_call_operand.hbm [shape: f32[60,60], index: 3, kind: input, shape index: {}]
  %s4 = inlined_call_operand.vmem [shape: f32[1,60], index: 4, kind: input, shape index: {}]
  %s5 = inlined_call_operand.vmem [shape: f32[1,60], index: 5, kind: input, shape index: {}]
  %s6 = inlined_call_operand.<no memory space> [shape: f32[1], index: 6, kind: input, shape index: {}]
  %s7 = inlined_call_operand.hbm [shape: f32[1,1,8], index: 7, kind: output, shape index: {}]
  %s8 = sld [smem:[#allocation0]]
  $region50: #{tpu_custom_call.1} parent=0
    _
  %s10 = ssub.s32 1, %s8
  %s11 = scalar_select 0, %s10, %s8
  %12 = sst [smem:[#allocation2]] %s6
  $region1: #{tpu_custom_call.1} parent=0
    #allocation3 [shape = 'u8[4096]{0}', space=vmem, size = 0x1000, scoped, tag = 'input window, operand 0, single buffered']
    #allocation4 [shape = 's32[1]{0}', space=sflag, size = 0x4, scoped, tag = 'scoped memory for tpu_custom_call.1']
    #allocation5 [shape = 's32[1]{0}', space=sflag, size = 0x4, scoped, tag = 'scoped memory for tpu_custom_call.1']
    #allocation6 [shape = 'u8[16384]{0}', space=vmem, size = 0x4000, scoped, tag = 'input window, operand 1, single buffered']
    #allocation7 [shape = 's32[1]{0}', space=sflag, size = 0x4, scoped, tag = 'scoped memory for tpu_custom_call.1']
    #allocation8 [shape = 'u8[32768]{0}', space=vmem, size = 0x8000, scoped, tag = 'input window, operand 3, single buffered']
    #allocation9 [shape = 'u8[512]{0}', space=vmem, size = 0x400, scoped, tag = 'output window, operand 0, single buffered']
    %13 = vsyncpa [#allocation4], 0
    %14 = vsyncpa [#allocation7], 0
    %15 = vsyncpa [#allocation5], 0
    // Predicated region
    $region2: #{tpu_custom_call.1} parent=1 // pred_check
      _
    $region3: #{tpu_custom_call.1} parent=1 // pred_check_branch
      %17 = sbr.rel (0) target = $region5
    $region4: #{tpu_custom_call.1} parent=1 // pred_region
      %19 = vsyncadd [#allocation4], 0
      %s21 = sshll.u32 %s0, 4
      %s22 = int_to_ptr.hbm [resolvable:$true] %s21
      %s23 = sshll.u32 [#allocation3], 4
      %s24 = int_to_ptr.vmem [resolvable:$true] %s23
      %26 = dma.hbm_to_vmem [thread:$0]  %s22, 128, %s24, [#allocation4]
    $region5: #{tpu_custom_call.1} parent=1 // pred_fallthru
      _
    // Predicated region
    $region6: #{tpu_custom_call.1} parent=1 // pred_check
      _
    $region7: #{tpu_custom_call.1} parent=1 // pred_check_branch
      %28 = sbr.rel (0) target = $region9
    $region8: #{tpu_custom_call.1} parent=1 // pred_region
      %30 = vsyncadd [#allocation7], 0
      %s31 = sshll.u32 %s1, 4
      %s32 = int_to_ptr.hbm [resolvable:$true] %s31
      %s33 = sshll.u32 [#allocation6], 4
      %s34 = int_to_ptr.vmem [resolvable:$true] %s33
      %39 = dma.hbm_to_vmem [thread:$0]  %s32, 512, %s34, [#allocation7], 128, 128, 8
    $region9: #{tpu_custom_call.1} parent=1 // pred_fallthru
      _
    // Predicated region
    $region10: #{tpu_custom_call.1} parent=1 // pred_check
      _
    $region11: #{tpu_custom_call.1} parent=1 // pred_check_branch
      %41 = sbr.rel (0) target = $region13
    $region12: #{tpu_custom_call.1} parent=1 // pred_region
      _
    $region13: #{tpu_custom_call.1} parent=1 // pred_fallthru
      _
    // Predicated region
    $region14: #{tpu_custom_call.1} parent=1 // pred_check
      _
    $region15: #{tpu_custom_call.1} parent=1 // pred_check_branch
      %43 = sbr.rel (0) target = $region17
    $region16: #{tpu_custom_call.1} parent=1 // pred_region
      %45 = vsyncadd [#allocation7], 0
      %s46 = sshll.u32 %s3, 4
      %s47 = int_to_ptr.hbm [resolvable:$true] %s46
      %s48 = sshll.u32 [#allocation8], 4
      %s49 = int_to_ptr.vmem [resolvable:$true] %s48
      %54 = dma.hbm_to_vmem [thread:$0]  %s47, 1024, %s49, [#allocation7], 128, 128, 8
    $region17: #{tpu_custom_call.1} parent=1 // pred_fallthru
      _
    // Predicated region
    $region18: #{tpu_custom_call.1} parent=1 // pred_check
      _
    $region19: #{tpu_custom_call.1} parent=1 // pred_check_branch
      %56 = sbr.rel (0) target = $region21
    $region20: #{tpu_custom_call.1} parent=1 // pred_region
      _
    $region21: #{tpu_custom_call.1} parent=1 // pred_fallthru
      _
    // Predicated region
    $region22: #{tpu_custom_call.1} parent=1 // pred_check
      _
    $region23: #{tpu_custom_call.1} parent=1 // pred_check_branch
      %58 = sbr.rel (0) target = $region25
    $region24: #{tpu_custom_call.1} parent=1 // pred_region
      _
    $region25: #{tpu_custom_call.1} parent=1 // pred_fallthru
      _
    // Predicated region
    $region26: #{tpu_custom_call.1} parent=1 // pred_check
      _
    $region27: #{tpu_custom_call.1} parent=1 // pred_check_branch
      %60 = sbr.rel (0) target = $region29
    $region28: #{tpu_custom_call.1} parent=1 // pred_region
      _
    $region29: #{tpu_custom_call.1} parent=1 // pred_fallthru
      _
    // Predicated region
    $region30: #{tpu_custom_call.1} parent=1 // pred_check
      _
    $region31: #{tpu_custom_call.1} parent=1 // pred_check_branch
      %62 = sbr.rel (0) target = $region33
    $region32: #{tpu_custom_call.1} parent=1 // pred_region
      %64 = dma.done [#allocation4], 128
    $region33: #{tpu_custom_call.1} parent=1 // pred_fallthru
      _
    // Predicated region
    $region34: #{tpu_custom_call.1} parent=1 // pred_check
      _
    $region35: #{tpu_custom_call.1} parent=1 // pred_check_branch
      %66 = sbr.rel (0) target = $region37
    $region36: #{tpu_custom_call.1} parent=1 // pred_region
      %68 = dma.done [#allocation7], 512
    $region37: #{tpu_custom_call.1} parent=1 // pred_fallthru
      _
    // Predicated region
    $region38: #{tpu_custom_call.1} parent=1 // pred_check
      _
    $region39: #{tpu_custom_call.1} parent=1 // pred_check_branch
      %70 = sbr.rel (0) target = $region41
    $region40: #{tpu_custom_call.1} parent=1 // pred_region
      %72 = dma.done [#allocation7], 1024
    $region41: #{tpu_custom_call.1} parent=1 // pred_fallthru
      _
    %v73 = vld [vmem:[#allocation3] sm:$0xff]
    %v74 = vld [vmem:[#allocation6] sm:$0xff]
    %v75 = vld [vmem:[#allocation6 + $0x8] sm:$0xff]
    %v76 = vld [vmem:[#allocation6 + $0x10] sm:$0xff]
    %v77 = vld [vmem:[#allocation6 + $0x18] sm:$0xff]
    %v78 = vld [vmem:[%s2] sm:$0x1]
    %v80 = vperm.slane %v78, 0
    %vm82 = vcmask 261120
    %v84 = vsel %vm82, %v73, 0
    %86 = vmatpush.msra.mxu0 0.0
    %87 = vmatpush.msra.mxu0 0.0
    %88 = vmatpush.msra.mxu0 0.0
    %89 = vmatpush.msra.mxu0 0.0
    %90 = vmatpush.msra.mxu0 0.0
    %91 = vmatpush.msra.mxu0 0.0
    %92 = vmatpush.msra.mxu0 0.0
    %93 = vmatpush.msra.mxu0 0.0
    %94 = vmatpush.msra.mxu0 0.0
    %95 = vmatpush.msra.mxu0 0.0
    %96 = vmatpush.msra.mxu0 0.0
    %97 = vmatpush.msra.mxu0 0.0
    %98 = vmatpush.msra.mxu0 %v77
    %99 = vmatpush.msra.mxu0 %v76
    %100 = vmatpush.msra.mxu0 %v75
    %101 = vmatpush.msra.mxu0 %v74
    %102 = vmatmul.f32.gmra.mxu0 %v84
    %v103 = vpop.f32.mrf.mxu0
    %v104 = vadd.f32 %v80, %v103
    %105 = vdwg.mxu0
    %v106 = vmax.f32 %v104, 0.0
    %v107 = vld [vmem:[#allocation8] sm:$0xff]
    %v108 = vld [vmem:[#allocation8 + $0x8] sm:$0xff]
    %v109 = vld [vmem:[#allocation8 + $0x10] sm:$0xff]
    %v110 = vld [vmem:[#allocation8 + $0x18] sm:$0xff]
    %v111 = vld [vmem:[#allocation8 + $0x20] sm:$0xff]
    %v112 = vld [vmem:[#allocation8 + $0x28] sm:$0xff]
    %v113 = vld [vmem:[#allocation8 + $0x30] sm:$0xff]
    %v114 = vld [vmem:[#allocation8 + $0x38] sm:$0xf]
    %v115 = vld [vmem:[%s4] sm:$0x1]
    %v117 = vperm.slane %v115, 0
    %vm119 = vcmask 490496
    %v121 = vsel %vm119, %v106, 0
    %vm123 = vcmask 1043456
    %v125 = vsel %vm123, %v114, 0
    %127 = vmatpush.msra.mxu0 0.0
    %128 = vmatpush.msra.mxu0 0.0
    %129 = vmatpush.msra.mxu0 0.0
    %130 = vmatpush.msra.mxu0 0.0
    %131 = vmatpush.msra.mxu0 0.0
    %132 = vmatpush.msra.mxu0 0.0
    %133 = vmatpush.msra.mxu0 0.0
    %134 = vmatpush.msra.mxu0 0.0
    %135 = vmatpush.msra.mxu0 %v125
    %136 = vmatpush.msra.mxu0 %v113
    %137 = vmatpush.msra.mxu0 %v112
    %138 = vmatpush.msra.mxu0 %v111
    %139 = vmatpush.msra.mxu0 %v110
    %140 = vmatpush.msra.mxu0 %v109
    %141 = vmatpush.msra.mxu0 %v108
    %142 = vmatpush.msra.mxu0 %v107
    %143 = vmatmul.f32.gmra.mxu0 %v121
    %v144 = vpop.f32.mrf.mxu0
    %v145 = vadd.f32 %v117, %v144
    %146 = vdwg.mxu0
    %v147 = vmax.f32 %v145, 0.0
    %v148 = vld [vmem:[%s5] sm:$0x1]
    %s149 = sld [smem:[#allocation2]]
    %v150 = vstv %s149
    %v152 = vsel %vm119, %v148, 0
    %v155 = vsel %vm119, %v147, 0
    %157 = vmatpush.xpose.msra.mxu0 0.0
    %158 = vmatpush.xpose.msra.mxu0 0.0
    %159 = vmatpush.xpose.msra.mxu0 0.0
    %160 = vmatpush.xpose.msra.mxu0 0.0
    %161 = vmatpush.xpose.msra.mxu0 0.0
    %162 = vmatpush.xpose.msra.mxu0 0.0
    %163 = vmatpush.xpose.msra.mxu0 0.0
    %164 = vmatpush.xpose.msra.mxu0 0.0
    %165 = vmatpush.xpose.msra.mxu0 0.0
    %166 = vmatpush.xpose.msra.mxu0 0.0
    %167 = vmatpush.xpose.msra.mxu0 0.0
    %168 = vmatpush.xpose.msra.mxu0 0.0
    %169 = vmatpush.xpose.msra.mxu0 0.0
    %170 = vmatpush.xpose.msra.mxu0 0.0
    %171 = vmatpush.xpose.msra.mxu0 0.0
    %172 = vmatpush.xpose.msra.mxu0 %v155
    %173 = vmatmul.f32.gmra.mxu0 %v152
    %v174 = vpop.f32.mrf.mxu0
    %v175 = vadd.f32 %v150, %v174
    %176 = vdwg.mxu0
    %v177 = vxor.u32 %v175, 2147483648
    %v178 = vmul.f32 %v177, 1.442695
    %v179 = vpow.pop %v178
    %v180 = vadd.f32 %v179, 1.0
    %v181 = vrcp.pop %v180
    %v182 = vmul.f32 %v180, %v181
    %v183 = vsub.f32 1.0, %v182
    %v184 = vmul.f32 %v181, %v183
    %v185 = vadd.f32 %v181, %v184
    %vm186 = vweird.f32 %v180
    %vm187 = vweird.f32 %v181
    %vm188 = vmor %vm186, %vm187
    %v189 = vsel %vm188, %v181, %v185
    %v190 = vand.u32 2147483647, %v180
    %vm191 = vcmp.eq.f32.partialorder %v190, 8.507059e+37
    %v192 = vand.u32 %v180, 2147483648
    %v193 = vor.u32 1.1754944e-38, %v192
    %v194 = vsel %vm191, %v193, %v189
    %v195 = vmul.f32 1.0, %v194
    %vm196 = vcmask 57344
    %197 = vst.msk [vmem:[#allocation9] sm:$0x1] %vm196, %v195
    // Predicated region
    $region42: #{tpu_custom_call.1} parent=1 // pred_check
      _
    $region43: #{tpu_custom_call.1} parent=1 // pred_check_branch
      %199 = sbr.rel (0) target = $region45
    $region44: #{tpu_custom_call.1} parent=1 // pred_region
      %201 = vsyncadd [#allocation5], 0
      %s203 = sshll.u32 [#allocation9], 4
      %s204 = int_to_ptr.vmem [resolvable:$true] %s203
      %s205 = sshll.u32 %s7, 4
      %s206 = int_to_ptr.hbm [resolvable:$true] %s205
      %208 = dma.vmem_to_hbm [thread:$0]  %s204, 16, %s206, [#allocation5]
    $region45: #{tpu_custom_call.1} parent=1 // pred_fallthru
      _
    // Predicated region
    $region46: #{tpu_custom_call.1} parent=1 // pred_check
      _
    $region47: #{tpu_custom_call.1} parent=1 // pred_check_branch
      %210 = sbr.rel (0) target = $region49
    $region48: #{tpu_custom_call.1} parent=1 // pred_region
      %212 = dma.done [#allocation5], 16
    $region49: #{tpu_custom_call.1} parent=1 // pred_fallthru
      _
    %213 = vsyncpa [#allocation4], 1
    %214 = vsyncpa [#allocation7], 1
    %215 = vsyncpa [#allocation5], 1

</llo_original>
